<compile_context>
chip_gen: v7x
topology: tpu7x:2x2x1
jax: 0.10.0
libtpu: 0.0.40
codegen_flags: <defaults>
</compile_context>

<pallas_src>
import functools

import jax
import jax.numpy as jnp
from jax.experimental import pallas as pl
from jax.experimental.pallas import tpu as pltpu

_MIB = 1024 * 1024


def _round_up(x, m):
    return ((x + m - 1) // m) * m


def _cdiv(a, b):
    return (a + b - 1) // b


def _balanced_tile(dim, preferred, align):
    """Largest tile <= round_up(preferred, align) that minimizes pad waste."""
    preferred = max(align, _round_up(preferred, align))
    if dim <= preferred:
        return _round_up(dim, align)
    n = _cdiv(dim, preferred)          # number of tiles at the preferred size
    return _round_up(_cdiv(dim, n), align)


def _vmem_capacity_bytes():
    try:
        info = pltpu.get_tpu_info()
        cap = getattr(info, "vmem_capacity_bytes", None)
        if cap:
            return max(int(cap), 32 * _MIB)
    except Exception:
        pass
    return 64 * _MIB  # conservative default (v7x per-TensorCore)


# ----------------------------------------------------------------------------
# Kernels
# ----------------------------------------------------------------------------
def _conv1d_fullk_kernel(x_ref, w_ref, b_ref, o_ref, *, compute_dtype):
    """K collapsed into a single block: one dot per output tile, bias in epilogue."""
    x = x_ref[...]
    w = w_ref[...]
    if compute_dtype is not None:
        x = x.astype(compute_dtype)
        w = w.astype(compute_dtype)
    acc = jnp.dot(x, w, preferred_element_type=jnp.float32)
    o_ref[...] = (acc + b_ref[...].astype(jnp.float32)).astype(o_ref.dtype)


def _conv1d_ksplit_kernel(x_ref, w_ref, b_ref, o_ref, acc_ref, *, compute_dtype):
    """Fallback for very large K: K-reduction last, f32 accumulator in VMEM."""
    k = pl.program_id(2)

    @pl.when(k == 0)
    def _():
        acc_ref[...] = jnp.broadcast_to(
            b_ref[...].astype(jnp.float32), acc_ref.shape
        )

    x = x_ref[...]
    w = w_ref[...]
    if compute_dtype is not None:
        x = x.astype(compute_dtype)
        w = w.astype(compute_dtype)
    acc_ref[...] += jnp.dot(x, w, preferred_element_type=jnp.float32)

    @pl.when(k == pl.num_programs(2) - 1)
    def _():
        o_ref[...] = acc_ref[...].astype(o_ref.dtype)


# ----------------------------------------------------------------------------
# Wrapper
# ----------------------------------------------------------------------------
def conv1d_forward(x, weight, bias=None, *, precision="float32"):
    """y = x @ weight + bias computed with a Pallas TPU kernel.

    x:       (..., in_features)
    weight:  (in_features, out_features)
    bias:    (out_features,) or None
    precision: "float32" (exact, operands kept in their dtype) or "bf16"
               (cast operand tiles to bfloat16 before the MXU dot; f32
               accumulation is kept, results differ slightly from f32).
    """
    in_features, out_features = weight.shape
    assert x.shape[-1] == in_features
    lead_shape = x.shape[:-1]
    M = 1
    for d in lead_shape:
        M *= d
    K, N = in_features, out_features

    out_dtype = x.dtype
    x2d = x.reshape(M, K)
    if bias is None:
        bias = jnp.zeros((N,), dtype=out_dtype)
    b2d = bias.reshape(1, N)

    compute_dtype = None
    if precision == "bf16" and jnp.dtype(x2d.dtype).itemsize > 2:
        compute_dtype = jnp.bfloat16

    xsz = jnp.dtype(x2d.dtype).itemsize
    wsz = jnp.dtype(weight.dtype).itemsize
    bsz = jnp.dtype(b2d.dtype).itemsize
    osz = jnp.dtype(out_dtype).itemsize

    # Sublane alignment of the M tile follows dtype packing (8/16/32).
    m_align = max(8, 32 // xsz)

    # --- per-generation VMEM budget ---------------------------------------
    cap = _vmem_capacity_bytes()
    budget = min(int(cap * 3 // 4), 100 * _MIB)   # ~96 MiB v5e/v6e, ~48 MiB v7x
    budget = max(budget, 24 * _MIB)

    K_p = _round_up(K, 128)

    def fullk_footprint(tm, tn):
        return (2 * tm * K_p * xsz        # x tiles (double-buffered)
                + 2 * K_p * tn * wsz      # weight tiles (double-buffered)
                + 2 * tm * tn * osz       # output tiles
                + 2 * tn * bsz            # bias tiles
                + tm * tn * 4)            # f32 dot-result headroom

    collapse_k = fullk_footprint(m_align, 128) <= budget

    if collapse_k:
        # ---------------- full-K (no reduction grid axis) path ------------
        tk = K_p
        tm_pref = 512
        tn_pref = 2048 if budget >= 80 * _MIB else 1024
        tm = _balanced_tile(M, tm_pref, m_align)
        tn = _balanced_tile(N, tn_pref, 128)
        for _ in range(64):
            if fullk_footprint(tm, tn) <= budget:
                break
            n_cost = (K_p * wsz + tm * osz) * tn
            m_cost = (K_p * xsz + tn * osz) * tm
            if tn > 128 and (n_cost >= m_cost or tm <= m_align):
                tn_pref = max(128, tn_pref // 2)
                tn = _balanced_tile(N, tn_pref, 128)
            elif tm > m_align:
                tm_pref = max(m_align, tm_pref // 2)
                tm = _balanced_tile(M, tm_pref, m_align)
            else:
                break

        M_p = _round_up(M, tm)
        N_p = _round_up(N, tn)

        if (M_p, K_p) != (M, K):
            x2d = jnp.pad(x2d, ((0, M_p - M), (0, K_p - K)))
        w2d = weight
        if (K_p, N_p) != (K, N):
            # TODO(synk): in the real module the static weight/bias padding
            # should be done once at load time, not per forward call.
            w2d = jnp.pad(weight, ((0, K_p - K), (0, N_p - N)))
        if N_p != N:
            b2d = jnp.pad(b2d, ((0, 0), (0, N_p - N)))

        n_m, n_n = M_p // tm, N_p // tn
        x_bytes = M_p * K_p * xsz
        w_bytes = K_p * N_p * wsz

        # Keep the LARGER operand's block index constant along the innermost
        # grid axis so Pallas skips its DMA (fetched exactly once from HBM).
        weight_resident = w_bytes >= x_bytes
        if n_n == 1:
            weight_resident = False   # single weight slab; keep M outermost
        if n_m == 1:
            weight_resident = True

        if weight_resident:
            grid = (n_n, n_m)
            x_spec = pl.BlockSpec((tm, K_p), lambda j, i: (i, 0))
            w_spec = pl.BlockSpec((K_p, tn), lambda j, i: (0, j))  # const along i
            b_spec = pl.BlockSpec((1, tn), lambda j, i: (0, j))
            o_spec = pl.BlockSpec((tm, tn), lambda j, i: (i, j))
            bytes_accessed = (n_n * M_p * K_p * xsz + K_p * N_p * wsz
                              + M_p * N_p * osz + N_p * bsz)
        else:
            grid = (n_m, n_n)
            x_spec = pl.BlockSpec((tm, K_p), lambda i, j: (i, 0))  # const along j
            w_spec = pl.BlockSpec((K_p, tn), lambda i, j: (0, j))
            b_spec = pl.BlockSpec((1, tn), lambda i, j: (0, j))
            o_spec = pl.BlockSpec((tm, tn), lambda i, j: (i, j))
            bytes_accessed = (M_p * K_p * xsz + n_m * K_p * N_p * wsz
                              + M_p * N_p * osz + n_m * N_p * bsz)

        kernel = functools.partial(_conv1d_fullk_kernel,
                                   compute_dtype=compute_dtype)
        scratch_shapes = []
        dim_sem = ("parallel", "parallel")
        footprint = fullk_footprint(tm, tn)

    else:
        # ---------------- huge-K fallback: split K, accumulate in VMEM ----
        tm_pref, tn_pref, tk_pref = 256, 512, 2048
        tm = _balanced_tile(M, tm_pref, m_align)
        tn = _balanced_tile(N, tn_pref, 128)
        tk = _balanced_tile(K, tk_pref, 128)

        def ksplit_footprint(tm_, tn_, tk_):
            return (2 * tm_ * tk_ * xsz + 2 * tk_ * tn_ * wsz
                    + 2 * tm_ * tn_ * osz + 2 * tn_ * bsz + tm_ * tn_ * 4)

        for _ in range(64):
            if ksplit_footprint(tm, tn, tk) <= budget:
                break
            if tk > 512:
                tk_pref = max(512, tk_pref // 2)
                tk = _balanced_tile(K, tk_pref, 128)
            elif tn > 128:
                tn_pref = max(128, tn_pref // 2)
                tn = _balanced_tile(N, tn_pref, 128)
            elif tm > m_align:
                tm_pref = max(m_align, tm_pref // 2)
                tm = _balanced_tile(M, tm_pref, m_align)
            else:
                break

        M_p = _round_up(M, tm)
        N_p = _round_up(N, tn)
        K_p = _round_up(K, tk)

        if (M_p, K_p) != (M, K):
            x2d = jnp.pad(x2d, ((0, M_p - M), (0, K_p - K)))
        w2d = weight
        if (K_p, N_p) != (K, N):
            w2d = jnp.pad(weight, ((0, K_p - K), (0, N_p - N)))
        if N_p != N:
            b2d = jnp.pad(b2d, ((0, 0), (0, N_p - N)))

        n_m, n_n, n_k = M_p // tm, N_p // tn, K_p // tk
        grid = (n_m, n_n, n_k)
        x_spec = pl.BlockSpec((tm, tk), lambda i, j, k: (i, k))
        w_spec = pl.BlockSpec((tk, tn), lambda i, j, k: (k, j))
        b_spec = pl.BlockSpec((1, tn), lambda i, j, k: (0, j))
        o_spec = pl.BlockSpec((tm, tn), lambda i, j, k: (i, j))
        bytes_accessed = (n_n * M_p * K_p * xsz + n_m * K_p * N_p * wsz
                          + M_p * N_p * osz + n_m * N_p * bsz)

        kernel = functools.partial(_conv1d_ksplit_kernel,
                                   compute_dtype=compute_dtype)
        scratch_shapes = [pltpu.VMEM((tm, tn), jnp.float32)]
        dim_sem = ("parallel", "parallel", "arbitrary")
        footprint = ksplit_footprint(tm, tn, tk)

    vmem_limit = int(min(max(footprint + 16 * _MIB, 32 * _MIB), cap - 4 * _MIB))

    cost = pl.CostEstimate(
        flops=int(2 * M_p * N_p * K_p),
        transcendentals=0,
        bytes_accessed=int(bytes_accessed),
    )

    out = pl.pallas_call(
        kernel,
        out_shape=jax.ShapeDtypeStruct((M_p, N_p), out_dtype),
        grid_spec=pltpu.PrefetchScalarGridSpec(
            num_scalar_prefetch=0,
            grid=grid,
            in_specs=[x_spec, w_spec, b_spec],
            out_specs=o_spec,
            scratch_shapes=scratch_shapes,
        ),
        compiler_params=pltpu.CompilerParams(
            dimension_semantics=dim_sem,
            vmem_limit_bytes=vmem_limit,
        ),
        cost_estimate=cost,
    )(x2d, w2d, b2d)

    if M_p != M or N_p != N:
        out = out[:M, :N]
    return out.reshape(*lead_shape, N)


if __name__ == "__main__":
    # Small shapes consistent with the module's forward:
    #   x: (batch=2, seq=8, in_features=32) -> y: (2, 8, out_features=64)
    batch, seq, in_features, out_features = 2, 8, 32, 64

    key = jax.random.PRNGKey(0)
    kx, kw, kb, kx2, kw2, kb2 = jax.random.split(key, 6)

    x = jax.random.normal(kx, (batch, seq, in_features), dtype=jnp.float32)
    weight = 0.02 * jax.random.normal(
        kw, (in_features, out_features), dtype=jnp.float32
    )
    bias = jax.random.normal(kb, (out_features,), dtype=jnp.float32)

    y = jax.block_until_ready(conv1d_forward(x, weight, bias))
    y_ref = x @ weight + bias
    assert y.shape == (batch, seq, out_features)
    assert jnp.allclose(y, y_ref, atol=1e-5, rtol=1e-5)

    # Non-divisible shapes exercise the pad-and-slice path
    # (K=40 -> 128, N=72 -> 128, M=15 -> 16).
    x2 = jax.random.normal(kx2, (3, 5, 40), dtype=jnp.float32)
    w2 = 0.02 * jax.random.normal(kw2, (40, 72), dtype=jnp.float32)
    b2 = jax.random.normal(kb2, (72,), dtype=jnp.float32)
    y2 = jax.block_until_ready(conv1d_forward(x2, w2, b2))
    assert jnp.allclose(y2, x2 @ w2 + b2, atol=1e-5, rtol=1e-5)

    # bias=None path.
    y3 = jax.block_until_ready(conv1d_forward(x2, w2, None))
    assert jnp.allclose(y3, x2 @ w2, atol=1e-5, rtol=1e-5)

    # Reduced-precision (bf16 MXU operands) path behind the flag.
    y4 = jax.block_until_ready(conv1d_forward(x, weight, bias, precision="bf16"))
    assert jnp.allclose(y4, y_ref, atol=5e-2, rtol=5e-2)

    print("KERNEL_OK")
</pallas_src>

<mosaic_0001>
module attributes {stable_mosaic.version = 11 : i64} {
  func.func @_conv1d_fullk_kernel(%arg0: i32, %arg1: i32, %arg2: memref<16x128xf32, #tpu.memory_space<vmem>>, %arg3: memref<128x128xf32, #tpu.memory_space<vmem>>, %arg4: memref<1x128xf32, #tpu.memory_space<vmem>>, %arg5: memref<16x128xf32, #tpu.memory_space<vmem>>) attributes {dimension_semantics = [#tpu.dimension_semantics<parallel>, #tpu.dimension_semantics<parallel>], iteration_bounds = array<i64: 1, 1>, scalar_prefetch = 0 : i64, scratch_operands = 0 : i64, tpu.core_type = #tpu.core_type<tc>, window_params = [{transform_indices = @transform_0, window_bounds = array<i64: 16, 128>}, {transform_indices = @transform_1, window_bounds = array<i64: 128, 128>}, {transform_indices = @transform_2, window_bounds = array<i64: 1, 128>}, {transform_indices = @transform_3, window_bounds = array<i64: 16, 128>}]} {
    %c0 = arith.constant 0 : index
    %c0_0 = arith.constant 0 : index
    %0 = vector.load %arg2[%c0, %c0_0] : memref<16x128xf32, #tpu.memory_space<vmem>>, vector<16x128xf32>
    %c0_1 = arith.constant 0 : index
    %c0_2 = arith.constant 0 : index
    %1 = vector.load %arg3[%c0_1, %c0_2] : memref<128x128xf32, #tpu.memory_space<vmem>>, vector<128x128xf32>
    %cst = arith.constant dense<0.000000e+00> : vector<16x128xf32>
    %2 = tpu.matmul %0, %1, %cst {dimension_numbers = #tpu.dot_dimension_numbers<[1], [0], [0], [1], [0, 0, 1, 1], [], []>} : vector<16x128xf32>, vector<128x128xf32>, vector<16x128xf32> -> vector<16x128xf32>
    %c0_3 = arith.constant 0 : index
    %c0_4 = arith.constant 0 : index
    %3 = vector.load %arg4[%c0_3, %c0_4] : memref<1x128xf32, #tpu.memory_space<vmem>>, vector<1x128xf32>
    %4 = vector.broadcast %3 : vector<1x128xf32> to vector<16x128xf32>
    %5 = arith.addf %2, %4 : vector<16x128xf32>
    %c0_5 = arith.constant 0 : index
    %c0_6 = arith.constant 0 : index
    %6 = vector.load %arg5[%c0_5, %c0_6] : memref<16x128xf32, #tpu.memory_space<vmem>>, vector<16x128xf32>
    tpu.vector_store %arg5[%c0_5, %c0_6], %5 {strides = array<i32>} : memref<16x128xf32, #tpu.memory_space<vmem>>, vector<16x128xf32>,
    return
  }
  func.func @transform_0(%arg0: i32, %arg1: i32) -> (i32, i32) {
    %c0_i32 = arith.constant 0 : i32
    %c0_i32_0 = arith.constant 0 : i32
    return %arg1, %c0_i32 : i32, i32
  }
  func.func @transform_1(%arg0: i32, %arg1: i32) -> (i32, i32) {
    %c0_i32 = arith.constant 0 : i32
    %c0_i32_0 = arith.constant 0 : i32
    return %c0_i32, %arg0 : i32, i32
  }
  func.func @transform_2(%arg0: i32, %arg1: i32) -> (i32, i32) {
    %c0_i32 = arith.constant 0 : i32
    %c0_i32_0 = arith.constant 0 : i32
    return %c0_i32, %arg0 : i32, i32
  }
  func.func @transform_3(%arg0: i32, %arg1: i32) -> (i32, i32) {
    %c0_i32 = arith.constant 0 : i32
    return %arg1, %arg0 : i32, i32
  }
}

</mosaic_0001>

<llo_original>
// kernel: tpu_custom_call.1
$region0: #{tpu_custom_call.1}
  #allocation0 [shape = 'u32[]', space=smem, size = 0x4, offset = 0x4, fixed_abs, tag = 'smem constant byte address 0x4 - core index']
  #allocation1 [shape = 'u32[144,128]{1,0:T(1,128)}', space=vmem, size = 0x12000, scoped, tag = 'internal scratch']
  %s0 = inlined_call_operand.hbm [shape: f32[16,128], index: 0, kind: input, shape index: {}]
  %s1 = inlined_call_operand.hbm [shape: f32[128,128], index: 1, kind: input, shape index: {}]
  %s2 = inlined_call_operand.vmem [shape: f32[1,128], index: 2, kind: input, shape index: {}]
  %s3 = inlined_call_operand.hbm [shape: f32[16,128], index: 3, kind: output, shape index: {}]
  %s4 = sld [smem:[#allocation0]]
  $region30: #{tpu_custom_call.1} parent=0
    _
  %s6 = ssub.s32 1, %s4
  %s7 = scalar_select 0, %s6, %s4
  $region1: #{tpu_custom_call.1} parent=0
    #allocation2 [shape = 'u8[8192]{0}', space=vmem, size = 0x2000, scoped, tag = 'input window, operand 0, single buffered']
    #allocation3 [shape = 's32[1]{0}', space=sflag, size = 0x4, scoped, tag = 'scoped memory for tpu_custom_call.1']
    #allocation4 [shape = 's32[1]{0}', space=sflag, size = 0x4, scoped, tag = 'scoped memory for tpu_custom_call.1']
    #allocation5 [shape = 'u8[65536]{0}', space=vmem, size = 0x10000, scoped, tag = 'input window, operand 1, single buffered']
    #allocation6 [shape = 's32[1]{0}', space=sflag, size = 0x4, scoped, tag = 'scoped memory for tpu_custom_call.1']
    #allocation7 [shape = 'u8[8192]{0}', space=vmem, size = 0x2000, scoped, tag = 'output window, operand 0, single buffered']
    %8 = vsyncpa [#allocation3], 0
    %9 = vsyncpa [#allocation6], 0
    %10 = vsyncpa [#allocation4], 0
    // Predicated region
    $region2: #{tpu_custom_call.1} parent=1 // pred_check
      _
    $region3: #{tpu_custom_call.1} parent=1 // pred_check_branch
      %12 = sbr.rel (0) target = $region5
    $region4: #{tpu_custom_call.1} parent=1 // pred_region
      %s14 = ssub.s32 256, 256
      %15 = vsyncadd [#allocation3], %s14
      %s16 = sshll.u32 [#allocation2], 4
      %s17 = int_to_ptr.vmem [resolvable:$true] %s16
      %22 = dma.hbm_to_vmem [thread:$0]  %s0, 256, %s17, [#allocation3], 128, 128, 8
    $region5: #{tpu_custom_call.1} parent=1 // pred_fallthru
      _
    // Predicated region
    $region6: #{tpu_custom_call.1} parent=1 // pred_check
      _
    $region7: #{tpu_custom_call.1} parent=1 // pred_check_branch
      %24 = sbr.rel (0) target = $region9
    $region8: #{tpu_custom_call.1} parent=1 // pred_region
      %s26 = ssub.s32 2048, 2048
      %27 = vsyncadd [#allocation6], %s26
      %s28 = sshll.u32 [#allocation5], 4
      %s29 = int_to_ptr.vmem [resolvable:$true] %s28
      %34 = dma.hbm_to_vmem [thread:$0]  %s1, 2048, %s29, [#allocation6], 128, 128, 8
    $region9: #{tpu_custom_call.1} parent=1 // pred_fallthru
      _
    // Predicated region
    $region10: #{tpu_custom_call.1} parent=1 // pred_check
      _
    $region11: #{tpu_custom_call.1} parent=1 // pred_check_branch
      %36 = sbr.rel (0) target = $region13
    $region12: #{tpu_custom_call.1} parent=1 // pred_region
      _
    $region13: #{tpu_custom_call.1} parent=1 // pred_fallthru
      _
    // Predicated region
    $region14: #{tpu_custom_call.1} parent=1 // pred_check
      _
    $region15: #{tpu_custom_call.1} parent=1 // pred_check_branch
      %38 = sbr.rel (0) target = $region17
    $region16: #{tpu_custom_call.1} parent=1 // pred_region
      %39 = dma.done [#allocation3], 256
    $region17: #{tpu_custom_call.1} parent=1 // pred_fallthru
      _
    // Predicated region
    $region18: #{tpu_custom_call.1} parent=1 // pred_check
      _
    $region19: #{tpu_custom_call.1} parent=1 // pred_check_branch
      %41 = sbr.rel (0) target = $region21
    $region20: #{tpu_custom_call.1} parent=1 // pred_region
      %42 = dma.done [#allocation6], 2048
    $region21: #{tpu_custom_call.1} parent=1 // pred_fallthru
      _
    %v43 = vld [vmem:[#allocation2] sm:$0xff]
    %v44 = vld [vmem:[#allocation2 + $0x8] sm:$0xff]
    %v45 = vld [vmem:[#allocation5] sm:$0xff]
    %v46 = vld [vmem:[#allocation5 + $0x8] sm:$0xff]
    %v47 = vld [vmem:[#allocation5 + $0x10] sm:$0xff]
    %v48 = vld [vmem:[#allocation5 + $0x18] sm:$0xff]
    %v49 = vld [vmem:[#allocation5 + $0x20] sm:$0xff]
    %v50 = vld [vmem:[#allocation5 + $0x28] sm:$0xff]
    %v51 = vld [vmem:[#allocation5 + $0x30] sm:$0xff]
    %v52 = vld [vmem:[#allocation5 + $0x38] sm:$0xff]
    %v53 = vld [vmem:[#allocation5 + $0x40] sm:$0xff]
    %v54 = vld [vmem:[#allocation5 + $0x48] sm:$0xff]
    %v55 = vld [vmem:[#allocation5 + $0x50] sm:$0xff]
    %v56 = vld [vmem:[#allocation5 + $0x58] sm:$0xff]
    %v57 = vld [vmem:[#allocation5 + $0x60] sm:$0xff]
    %v58 = vld [vmem:[#allocation5 + $0x68] sm:$0xff]
    %v59 = vld [vmem:[#allocation5 + $0x70] sm:$0xff]
    %v60 = vld [vmem:[#allocation5 + $0x78] sm:$0xff]
    %v61 = vld [vmem:[%s2] sm:$0x1]
    %v63 = vlaneseq
    %v64 = vshrl.u32 %v63, 7
    %v65 = vsub.s32 0, %v64
    %v66 = vrot.slane %v61, %v65
    %68 = vmatprep.subr.mxu0 0.0
    %69 = vmatpush1.msra.mxu0 %v45
    %70 = vmatprep.subr.mxu0 0.0
    %71 = vmatpush1.msra.mxu0 %v46
    %72 = vmatprep.subr.mxu0 0.0
    %73 = vmatpush1.msra.mxu0 %v47
    %74 = vmatprep.subr.mxu0 0.0
    %75 = vmatpush1.msra.mxu0 %v48
    %76 = vmatprep.subr.mxu0 0.0
    %77 = vmatpush1.msra.mxu0 %v49
    %78 = vmatprep.subr.mxu0 0.0
    %79 = vmatpush1.msra.mxu0 %v50
    %80 = vmatprep.subr.mxu0 0.0
    %81 = vmatpush1.msra.mxu0 %v51
    %82 = vmatprep.subr.mxu0 0.0
    %83 = vmatpush1.msra.mxu0 %v52
    %84 = vmatprep.subr.mxu0 0.0
    %85 = vmatpush1.msra.mxu0 %v53
    %86 = vmatprep.subr.mxu0 0.0
    %87 = vmatpush1.msra.mxu0 %v54
    %88 = vmatprep.subr.mxu0 0.0
    %89 = vmatpush1.msra.mxu0 %v55
    %90 = vmatprep.subr.mxu0 0.0
    %91 = vmatpush1.msra.mxu0 %v56
    %92 = vmatprep.subr.mxu0 0.0
    %93 = vmatpush1.msra.mxu0 %v57
    %94 = vmatprep.subr.mxu0 0.0
    %95 = vmatpush1.msra.mxu0 %v58
    %96 = vmatprep.subr.mxu0 0.0
    %97 = vmatpush1.msra.mxu0 %v59
    %98 = vmatprep.subr.mxu0 0.0
    %99 = vmatpush1.msra.mxu0 %v60
    %100 = vmatprep.subr.mxu0 0.0
    %101 = vmatpush1.msra.mxu0 0.0
    %102 = vmatprep.subr.mxu0 0.0
    %103 = vmatpush1.msra.mxu0 0.0
    %104 = vmatprep.subr.mxu0 0.0
    %105 = vmatpush1.msra.mxu0 0.0
    %106 = vmatprep.subr.mxu0 0.0
    %107 = vmatpush1.msra.mxu0 0.0
    %108 = vmatprep.subr.mxu0 0.0
    %109 = vmatpush1.msra.mxu0 0.0
    %110 = vmatprep.subr.mxu0 0.0
    %111 = vmatpush1.msra.mxu0 0.0
    %112 = vmatprep.subr.mxu0 0.0
    %113 = vmatpush1.msra.mxu0 0.0
    %114 = vmatprep.subr.mxu0 0.0
    %115 = vmatpush1.msra.mxu0 0.0
    %116 = vmatprep.subr.mxu0 0.0
    %117 = vmatpush1.msra.mxu0 0.0
    %118 = vmatprep.subr.mxu0 0.0
    %119 = vmatpush1.msra.mxu0 0.0
    %120 = vmatprep.subr.mxu0 0.0
    %121 = vmatpush1.msra.mxu0 0.0
    %122 = vmatprep.subr.mxu0 0.0
    %123 = vmatpush1.msra.mxu0 0.0
    %124 = vmatprep.subr.mxu0 0.0
    %125 = vmatpush1.msra.mxu0 0.0
    %126 = vmatprep.subr.mxu0 0.0
    %127 = vmatpush1.msra.mxu0 0.0
    %128 = vmatprep.subr.mxu0 0.0
    %129 = vmatpush1.msra.mxu0 0.0
    %130 = vmatprep.subr.mxu0 0.0
    %131 = vmatpush1.msra.mxu0 0.0
    %132 = vmatprep.mubr.f32.mxu0 0.0
    %133 = vmatmul.mubr.f32.gmra.mrb[0].mxu0 %v43
    %v134 = vpop.f32.mrb[0].mxu0
    %v135 = vadd.f32 %v66, %v134
    %v136 = vpop.f32.mrb[0].mxu0
    %137 = vmatprep.mubr.f32.mxu0 0.0
    %138 = vmatmul.mubr.f32.gmra.mrb[0].mxu0 %v44
    %v139 = vpop.f32.mrb[0].mxu0
    %v140 = vadd.f32 %v66, %v139
    %v141 = vpop.f32.mrb[0].mxu0
    %142 = vdwg.mxu0
    %143 = vst [vmem:[#allocation7] sm:$0xff] %v135
    %144 = vst [vmem:[#allocation7 + $0x8] sm:$0xff] %v140
    // Predicated region
    $region22: #{tpu_custom_call.1} parent=1 // pred_check
      _
    $region23: #{tpu_custom_call.1} parent=1 // pred_check_branch
      %146 = sbr.rel (0) target = $region25
    $region24: #{tpu_custom_call.1} parent=1 // pred_region
      %s148 = ssub.s32 256, 256
      %149 = vsyncadd [#allocation4], %s148
      %s150 = sshll.u32 [#allocation7], 4
      %s151 = int_to_ptr.vmem [resolvable:$true] %s150
      %156 = dma.vmem_to_hbm [thread:$0]  %s151, 256, %s3, [#allocation4], 128, 128, 8
    $region25: #{tpu_custom_call.1} parent=1 // pred_fallthru
      _
    // Predicated region
    $region26: #{tpu_custom_call.1} parent=1 // pred_check
      _
    $region27: #{tpu_custom_call.1} parent=1 // pred_check_branch
      %158 = sbr.rel (0) target = $region29
    $region28: #{tpu_custom_call.1} parent=1 // pred_region
      %159 = dma.done [#allocation4], 256
    $region29: #{tpu_custom_call.1} parent=1 // pred_fallthru
      _
    %160 = vsyncpa [#allocation3], 1
    %161 = vsyncpa [#allocation6], 1
    %162 = vsyncpa [#allocation4], 1

</llo_original>
